<compile_context>
chip_gen: v7x
topology: tpu7x:2x2x1
jax: 0.10.0
libtpu: 0.0.40
codegen_flags: <defaults>
</compile_context>

<pallas_src>
import jax
import jax.numpy as jnp
from jax.experimental import pallas as pl
from jax.experimental.pallas import tpu as pltpu


def _fpn_up_kernel(x_ref, res_ref, w_ref, b_ref, o_ref):
    # x_ref:   (TH//2, Wo_k, Cout)     top-down input (already W-repeated), f32
    # res_ref: (TH*Wo_k, Cin)          lateral pixels, lateral_dtype (bf16/f32)
    # w_ref:   (Cin, Cout)             BN-folded 1x1 conv weight, lateral_dtype
    # b_ref:   (1, Cout)               BN-folded bias, f32
    # o_ref:   (TH//2, 2, Wo_k, Cout)  output rows grouped as (x-row, repeat, W)
    th2, _, wo, co = o_ref.shape

    # ConvBnAct(res): 1x1 conv as a lane-dense MXU matmul (f32 accumulate)
    # + folded BN bias + ReLU.
    y = jnp.dot(res_ref[...], w_ref[...], preferred_element_type=jnp.float32)
    y = jnp.maximum(y + b_ref[...], 0.0)                    # (TH*Wo_k, Cout) f32

    # Layout-preserving reshape (Wo_k % 8 == 0 is enforced by the wrapper), then
    # fuse the 2x nearest H-upsample of x as a broadcast in the add.  No
    # H-repeated x temporary is materialized.
    y4 = y.reshape(th2, 2, wo, co)
    o_ref[...] = (x_ref[...][:, None, :, :].astype(jnp.float32) + y4).astype(o_ref.dtype)


def fpn_up_layer(x, res, conv_w, bn_gamma, bn_beta, bn_mean, bn_var,
                 eps=1e-5, lateral_dtype=jnp.bfloat16, min_grid_steps=4,
                 max_tile_rows=None):
    """x:      (B, Cout, H, W)    NCHW (top-down path)
       res:    (B, Cin, 2H, 2W)   NCHW (lateral path)
       conv_w: (Cout, Cin)        1x1 conv weight (kernel dims squeezed)
       returns (B, Cout, 2H, 2W)  NCHW
    """
    B, Cout, H, W = x.shape
    Br, Cin, Ho, Wo = res.shape
    assert Br == B and Ho == 2 * H and Wo == 2 * W

    out_dtype = x.dtype
    bx = jnp.dtype(out_dtype).itemsize           # x / out stream bytes
    br = jnp.dtype(lateral_dtype).itemsize       # res / weight stream bytes

    # --- fold eval-mode BatchNorm into the 1x1 conv ---------------------------
    scale = bn_gamma / jnp.sqrt(bn_var + eps)                       # (Cout,)
    w_folded = (conv_w * scale[:, None]).T.astype(lateral_dtype)    # (Cin, Cout)
    b_folded = (bn_beta - bn_mean * scale)[None, :].astype(jnp.float32)

    # --- layout glue (NCHW -> NHWC).  W repeat of x happens here, while x is
    # still 4x smaller than the output; the H repeat happens inside the kernel.
    x_nhwc = jnp.transpose(x, (0, 2, 3, 1))                         # (B, H, W, Cout)
    x_wrep = jnp.repeat(x_nhwc, 2, axis=2)                          # (B, H, Wo, Cout)
    res_nhwc = jnp.transpose(res, (0, 2, 3, 1)).astype(lateral_dtype)  # (B, Ho, Wo, Cin)

    # Pad width so in-kernel reshapes are layout-preserving (Wo_k % 8 == 0).
    wo_pad = (-Wo) % 8
    Wo_k = Wo + wo_pad
    if wo_pad:
        x_wrep = jnp.pad(x_wrep, ((0, 0), (0, 0), (0, wo_pad), (0, 0)))
        res_nhwc = jnp.pad(res_nhwc, ((0, 0), (0, 0), (0, wo_pad), (0, 0)))

    x_r = x_wrep.reshape(B * H, Wo_k, Cout)                 # half the output rows
    res_r = res_nhwc.reshape(B * Ho * Wo_k, Cin)            # flat output pixels

    # --- generation-aware VMEM budget & tile selection ------------------------
    try:
        vmem_cap = int(getattr(pltpu.get_tpu_info(), "vmem_capacity_bytes",
                               64 * 1024 * 1024))
    except Exception:                                        # not queryable -> v7x-safe
        vmem_cap = 64 * 1024 * 1024
    # ~48 MiB on v7x (64 MiB VMEM/TC), ~100 MiB on v5e/v6e (128 MiB).
    vmem_limit = max(32 * 1024 * 1024,
                     min(vmem_cap - 16 * 1024 * 1024, int(0.8 * vmem_cap)))

    # Per output image-row bytes, counting BOTH pipeline buffers of each stream
    # plus the in-kernel f32 conv/ReLU temporary (x is half-height, so its two
    # buffers together cost one row-equivalent).
    per_row = Wo_k * (Cout * bx                 # x stream
                      + 2 * Cin * br            # res stream (double-buffered)
                      + 2 * Cout * bx           # out stream (double-buffered)
                      + 4 * Cout)               # f32 matmul/bias/ReLU temporary
    fixed = 2 * Cin * Cout * br + 2 * Cout * 4 + 6 * 1024 * 1024  # weights + slack
    stream_budget = max(vmem_limit - fixed, 2 * 1024 * 1024)

    n_rows = B * Ho                              # output image rows
    th = min(int(stream_budget // per_row),                       # VMEM cap
             max(2, n_rows // max(int(min_grid_steps), 1)))       # >= N grid steps
    if max_tile_rows is not None:
        th = min(th, int(max_tile_rows))
    th = max(2, (int(th) // 2) * 2)              # whole H-pairs per tile

    grid_steps = -(-n_rows // th)                # pad-to-tile (no divisor search)
    n_rows_pad = grid_steps * th
    row_pad = n_rows_pad - n_rows                # even (n_rows and th are even)
    if row_pad:
        x_r = jnp.pad(x_r, ((0, row_pad // 2), (0, 0), (0, 0)))
        res_r = jnp.pad(res_r, ((0, row_pad * Wo_k), (0, 0)))

    out4 = pl.pallas_call(
        _fpn_up_kernel,
        out_shape=jax.ShapeDtypeStruct((n_rows_pad // 2, 2, Wo_k, Cout), out_dtype),
        grid_spec=pltpu.PrefetchScalarGridSpec(
            num_scalar_prefetch=0,
            grid=(grid_steps,),
            in_specs=[
                pl.BlockSpec((th // 2, Wo_k, Cout), lambda t: (t, 0, 0)),
                pl.BlockSpec((th * Wo_k, Cin), lambda t: (t, 0)),
                pl.BlockSpec((Cin, Cout), lambda t: (0, 0)),
                pl.BlockSpec((1, Cout), lambda t: (0, 0)),
            ],
            # Cout on lanes: lane-dense stores for Cout >= 128 (production FPN);
            # Cout < 128 heads fall back to masked vst (known slow path).
            out_specs=pl.BlockSpec((th // 2, 2, Wo_k, Cout), lambda t: (t, 0, 0, 0)),
        ),
        compiler_params=pltpu.CompilerParams(
            dimension_semantics=("parallel",),
            vmem_limit_bytes=vmem_limit,
        ),
    )(x_r, res_r, w_folded, b_folded)

    out = out4[: B * H].reshape(B, Ho, Wo_k, Cout)
    if wo_pad:
        out = out[:, :, :Wo, :]
    # NHWC -> NCHW to match the PyTorch API (one extra HBM pass; callers that
    # can consume NHWC directly should skip this transpose).
    return jnp.transpose(out, (0, 3, 1, 2))


if __name__ == "__main__":
    key = jax.random.PRNGKey(0)
    k1, k2, k3, k4, k5, k6, k7 = jax.random.split(key, 7)

    # Small shapes consistent with the module:
    #   x   (top-down path, already out_features channels): (B, Cout, H, W)
    #   res (lateral path, in_features channels):           (B, Cin, 2H, 2W)
    B, Cin, Cout, H, W = 2, 4, 8, 8, 8
    x = jax.random.normal(k1, (B, Cout, H, W), jnp.float32)
    res = jax.random.normal(k2, (B, Cin, 2 * H, 2 * W), jnp.float32)

    # ConvBnAct(in_features=Cin, out_features=Cout, kernel_size=1):
    #   Conv2d(Cin, Cout, 1, bias=False) -> BatchNorm2d(Cout) -> ReLU
    conv_w = jax.random.normal(k3, (Cout, Cin), jnp.float32) * 0.1
    bn_gamma = jax.random.uniform(k4, (Cout,), jnp.float32, 0.5, 1.5)
    bn_beta = jax.random.normal(k5, (Cout,), jnp.float32) * 0.1
    bn_mean = jax.random.normal(k6, (Cout,), jnp.float32) * 0.1
    bn_var = jax.random.uniform(k7, (Cout,), jnp.float32, 0.5, 1.5)

    def reference(x_, res_):
        x_up = jnp.repeat(jnp.repeat(x_, 2, axis=2), 2, axis=3)
        conv = jnp.einsum("oi,bihw->bohw", conv_w, res_)
        s = bn_gamma / jnp.sqrt(bn_var + 1e-5)
        bn = (conv * s[None, :, None, None]
              + (bn_beta - bn_mean * s)[None, :, None, None])
        return x_up + jnp.maximum(bn, 0.0)

    ref = reference(x, res)

    # Default path: bf16 lateral stream / bf16 MXU operands, f32 accumulation.
    out_bf16 = jax.block_until_ready(
        fpn_up_layer(x, res, conv_w, bn_gamma, bn_beta, bn_mean, bn_var))
    assert out_bf16.shape == (B, Cout, 2 * H, 2 * W)
    assert jnp.allclose(out_bf16, ref, atol=2e-2, rtol=2e-2)

    # Full-f32 path: matches the reference tightly; the forced small tile
    # exercises the grid, the index maps and the row-padding (tail) path.
    out_f32 = jax.block_until_ready(
        fpn_up_layer(x, res, conv_w, bn_gamma, bn_beta, bn_mean, bn_var,
                     lateral_dtype=jnp.float32, max_tile_rows=6))
    assert jnp.allclose(out_f32, ref, atol=1e-5, rtol=1e-5)

    # Odd spatial size: exercises the width pad (Wo % 8 != 0).
    H2, W2 = 5, 7
    x2 = jax.random.normal(k1, (B, Cout, H2, W2), jnp.float32)
    res2 = jax.random.normal(k2, (B, Cin, 2 * H2, 2 * W2), jnp.float32)
    ref2 = reference(x2, res2)
    out2 = jax.block_until_ready(
        fpn_up_layer(x2, res2, conv_w, bn_gamma, bn_beta, bn_mean, bn_var,
                     lateral_dtype=jnp.float32))
    assert jnp.allclose(out2, ref2, atol=1e-5, rtol=1e-5)

    print("KERNEL_OK")
</pallas_src>

<mosaic_0001>
module attributes {stable_mosaic.version = 11 : i64} {
  func.func @_fpn_up_kernel(%arg0: i32, %arg1: memref<4x16x8xf32, #tpu.memory_space<vmem>>, %arg2: memref<128x4xbf16, #tpu.memory_space<vmem>>, %arg3: memref<4x8xbf16, #tpu.memory_space<vmem>>, %arg4: memref<1x8xf32, #tpu.memory_space<vmem>>, %arg5: memref<4x2x16x8xf32, #tpu.memory_space<vmem>>) attributes {dimension_semantics = [#tpu.dimension_semantics<parallel>], iteration_bounds = array<i64: 4>, scalar_prefetch = 0 : i64, scratch_operands = 0 : i64, tpu.core_type = #tpu.core_type<tc>, window_params = [{transform_indices = @transform_0, window_bounds = array<i64: 4, 16, 8>}, {transform_indices = @transform_1, window_bounds = array<i64: 128, 4>}, {pipeline_mode = #tpu.pipeline_mode<synchronous>, transform_indices = @transform_2, window_bounds = array<i64: 4, 8>}, {pipeline_mode = #tpu.pipeline_mode<synchronous>, transform_indices = @transform_3, window_bounds = array<i64: 1, 8>}, {transform_indices = @transform_4, window_bounds = array<i64: 4, 2, 16, 8>}]} {
    %c0 = arith.constant 0 : index
    %c0_0 = arith.constant 0 : index
    %0 = vector.load %arg2[%c0, %c0_0] : memref<128x4xbf16, #tpu.memory_space<vmem>>, vector<128x4xbf16>
    %c0_1 = arith.constant 0 : index
    %c0_2 = arith.constant 0 : index
    %1 = vector.load %arg3[%c0_1, %c0_2] : memref<4x8xbf16, #tpu.memory_space<vmem>>, vector<4x8xbf16>
    %cst = arith.constant dense<0.000000e+00> : vector<128x8xf32>
    %2 = tpu.matmul %0, %1, %cst {dimension_numbers = #tpu.dot_dimension_numbers<[1], [0], [0], [1], [0, 0, 1, 1], [], []>} : vector<128x4xbf16>, vector<4x8xbf16>, vector<128x8xf32> -> vector<128x8xf32>
    %c0_3 = arith.constant 0 : index
    %c0_4 = arith.constant 0 : index
    %3 = vector.load %arg4[%c0_3, %c0_4] : memref<1x8xf32, #tpu.memory_space<vmem>>, vector<1x8xf32>
    %4 = vector.broadcast %3 : vector<1x8xf32> to vector<128x8xf32>
    %5 = arith.addf %2, %4 : vector<128x8xf32>
    %cst_5 = arith.constant 0.000000e+00 : f32
    %6 = vector.broadcast %cst_5 : f32 to vector<128x8xf32>
    %7 = arith.maximumf %5, %6 : vector<128x8xf32>
    %8 = vector.shape_cast %7 : vector<128x8xf32> to vector<4x2x16x8xf32>
    %c0_6 = arith.constant 0 : index
    %c0_7 = arith.constant 0 : index
    %c0_8 = arith.constant 0 : index
    %9 = vector.load %arg1[%c0_6, %c0_7, %c0_8] : memref<4x16x8xf32, #tpu.memory_space<vmem>>, vector<4x16x8xf32>
    %10 = vector.shape_cast %9 : vector<4x16x8xf32> to vector<4x1x16x8xf32>
    %11 = vector.broadcast %10 : vector<4x1x16x8xf32> to vector<4x2x16x8xf32>
    %12 = arith.addf %11, %8 : vector<4x2x16x8xf32>
    %c0_9 = arith.constant 0 : index
    %c0_10 = arith.constant 0 : index
    %c0_11 = arith.constant 0 : index
    %c0_12 = arith.constant 0 : index
    %13 = vector.load %arg5[%c0_9, %c0_10, %c0_11, %c0_12] : memref<4x2x16x8xf32, #tpu.memory_space<vmem>>, vector<4x2x16x8xf32>
    tpu.vector_store %arg5[%c0_9, %c0_10, %c0_11, %c0_12], %12 {strides = array<i32>} : memref<4x2x16x8xf32, #tpu.memory_space<vmem>>, vector<4x2x16x8xf32>,
    return
  }
  func.func @transform_0(%arg0: i32) -> (i32, i32, i32) {
    %c0_i32 = arith.constant 0 : i32
    %c0_i32_0 = arith.constant 0 : i32
    %c0_i32_1 = arith.constant 0 : i32
    return %arg0, %c0_i32, %c0_i32_0 : i32, i32, i32
  }
  func.func @transform_1(%arg0: i32) -> (i32, i32) {
    %c0_i32 = arith.constant 0 : i32
    %c0_i32_0 = arith.constant 0 : i32
    return %arg0, %c0_i32 : i32, i32
  }
  func.func @transform_2(%arg0: i32) -> (i32, i32) {
    %c0_i32 = arith.constant 0 : i32
    %c0_i32_0 = arith.constant 0 : i32
    %c0_i32_1 = arith.constant 0 : i32
    return %c0_i32, %c0_i32_0 : i32, i32
  }
  func.func @transform_3(%arg0: i32) -> (i32, i32) {
    %c0_i32 = arith.constant 0 : i32
    %c0_i32_0 = arith.constant 0 : i32
    %c0_i32_1 = arith.constant 0 : i32
    return %c0_i32, %c0_i32_0 : i32, i32
  }
  func.func @transform_4(%arg0: i32) -> (i32, i32, i32, i32) {
    %c0_i32 = arith.constant 0 : i32
    %c0_i32_0 = arith.constant 0 : i32
    %c0_i32_1 = arith.constant 0 : i32
    %c0_i32_2 = arith.constant 0 : i32
    return %arg0, %c0_i32, %c0_i32_0, %c0_i32_1 : i32, i32, i32, i32
  }
}

</mosaic_0001>

<llo_original>
// kernel: tpu_custom_call.1
$region0: #{tpu_custom_call.1}
  #allocation0 [shape = 'u32[]', space=smem, size = 0x4, offset = 0x4, fixed_abs, tag = 'smem constant byte address 0x4 - core index']
  #allocation1 [shape = 'u32[144,128]{1,0:T(1,128)}', space=vmem, size = 0x12000, scoped, tag = 'internal scratch']
  %s0 = inlined_call_operand.vmem [shape: f32[16,16,8], index: 0, kind: input, shape index: {}]
  %s1 = inlined_call_operand.vmem [shape: bf16[512,4], index: 1, kind: input, shape index: {}]
  %s2 = inlined_call_operand.vmem [shape: bf16[4,8], index: 2, kind: input, shape index: {}]
  %s3 = inlined_call_operand.vmem [shape: f32[1,8], index: 3, kind: input, shape index: {}]
  %s4 = inlined_call_operand.vmem [shape: f32[16,2,16,8], index: 4, kind: output, shape index: {}]
  %s5 = sld [smem:[#allocation0]]
  $region49: #{tpu_custom_call.1} parent=0
    _
  %s7 = ssub.s32 1, %s5
  %s8 = scalar_select 0, %s7, %s5
  loop: start=0, step=1, limit=6
  $region2: #{tpu_custom_call.1} parent=0 // loop_pre_header
    _
  $region3: #{tpu_custom_call.1} parent=0 // loop_header
    %s10 = sphi 0, %s14
    %p11 = scmp.ge.s32.totalorder %s10, 6
    %s20 = sphi 0, %s22
    %s23 = sphi 0, %s20
    %s24 = sphi 0, %s23
    %s40 = sphi 0, %s24
    %s46 = sphi 0, %s48
    %s49 = sphi 0, %s46
    %s50 = sphi 0, %s49
    %s66 = sphi 0, %s50
    %s70 = sphi 0, %s70
    %s72 = sphi 0, %s70
    %s73 = sphi 0, %s72
    %s87 = sphi 0, %s73
    %s91 = sphi 0, %s91
    %s93 = sphi 0, %s91
    %s94 = sphi 0, %s93
    %s108 = sphi 0, %s94
    %s114 = sphi 0, %s116
    %s117 = sphi 0, %s114
    %s118 = sphi 0, %s117
    %s134 = sphi 0, %s118
  $region4: #{tpu_custom_call.1} parent=0 // loop_header_branch
    %13 = sbr.rel (%p11) target = $region8
  $region5: #{tpu_custom_call.1} parent=0 // loop_body
    %s15 = ssub.s32 %s10, 1
    %s16 = ssub.s32 %s10, 2
    %s17 = sadd.s32 %s10, 1
    %s18 = ssub.s32 %s10, %s17
    %p19 = scmp.eq.s32.totalorder %s18, 0
    %s21 = sadd.s32 %s20, 1
    %s22 = scalar_select %p19, %s20, %s21
    %p25 = pneg %p19
    %p26 = scmp.eq.s32.totalorder %s10, 3
    %p27 = por %p25, %p26
    %p28 = scmp.ne.s32.totalorder %s20, %s23
    %p29 = scmp.eq.s32.totalorder %s10, 0
    %p30 = por %p28, %p29
    %p31 = scmp.ne.s32.totalorder %s20, %s23
    %p32 = scmp.eq.s32.totalorder %s15, 3
    %p33 = por %p31, %p32
    %p34 = scmp.ne.s32.totalorder %s23, %s24
    %p35 = scmp.eq.s32.totalorder %s15, 0
    %p36 = por %p34, %p35
    %p37 = scmp.ne.s32.totalorder %s23, %s24
    %p38 = scmp.eq.s32.totalorder %s16, 3
    %p39 = por %p37, %p38
    %p41 = scmp.ne.s32.totalorder %s24, %s40
    %p42 = scmp.eq.s32.totalorder %s16, 0
    %p43 = por %p41, %p42
    %s44 = ssub.s32 %s10, %s17
    %p45 = scmp.eq.s32.totalorder %s44, 0
    %s47 = sadd.s32 %s46, 1
    %s48 = scalar_select %p45, %s46, %s47
    %p51 = pneg %p45
    %p52 = scmp.eq.s32.totalorder %s10, 3
    %p53 = por %p51, %p52
    %p54 = scmp.ne.s32.totalorder %s46, %s49
    %p55 = scmp.eq.s32.totalorder %s10, 0
    %p56 = por %p54, %p55
    %p57 = scmp.ne.s32.totalorder %s46, %s49
    %p58 = scmp.eq.s32.totalorder %s15, 3
    %p59 = por %p57, %p58
    %p60 = scmp.ne.s32.totalorder %s49, %s50
    %p61 = scmp.eq.s32.totalorder %s15, 0
    %p62 = por %p60, %p61
    %p63 = scmp.ne.s32.totalorder %s49, %s50
    %p64 = scmp.eq.s32.totalorder %s16, 3
    %p65 = por %p63, %p64
    %p67 = scmp.ne.s32.totalorder %s50, %s66
    %p68 = scmp.eq.s32.totalorder %s16, 0
    %p69 = por %p67, %p68
    %s71 = sadd.s32 %s70, 1
    %p74 = scmp.eq.s32.totalorder %s10, 3
    %p75 = scmp.ne.s32.totalorder %s70, %s72
    %p76 = scmp.eq.s32.totalorder %s10, 0
    %p77 = por %p75, %p76
    %p78 = scmp.ne.s32.totalorder %s70, %s72
    %p79 = scmp.eq.s32.totalorder %s15, 3
    %p80 = por %p78, %p79
    %p81 = scmp.ne.s32.totalorder %s72, %s73
    %p82 = scmp.eq.s32.totalorder %s15, 0
    %p83 = por %p81, %p82
    %p84 = scmp.ne.s32.totalorder %s72, %s73
    %p85 = scmp.eq.s32.totalorder %s16, 3
    %p86 = por %p84, %p85
    %p88 = scmp.ne.s32.totalorder %s73, %s87
    %p89 = scmp.eq.s32.totalorder %s16, 0
    %p90 = por %p88, %p89
    %s92 = sadd.s32 %s91, 1
    %p95 = scmp.eq.s32.totalorder %s10, 3
    %p96 = scmp.ne.s32.totalorder %s91, %s93
    %p97 = scmp.eq.s32.totalorder %s10, 0
    %p98 = por %p96, %p97
    %p99 = scmp.ne.s32.totalorder %s91, %s93
    %p100 = scmp.eq.s32.totalorder %s15, 3
    %p101 = por %p99, %p100
    %p102 = scmp.ne.s32.totalorder %s93, %s94
    %p103 = scmp.eq.s32.totalorder %s15, 0
    %p104 = por %p102, %p103
    %p105 = scmp.ne.s32.totalorder %s93, %s94
    %p106 = scmp.eq.s32.totalorder %s16, 3
    %p107 = por %p105, %p106
    %p109 = scmp.ne.s32.totalorder %s94, %s108
    %p110 = scmp.eq.s32.totalorder %s16, 0
    %p111 = por %p109, %p110
    %s112 = ssub.s32 %s10, %s17
    %p113 = scmp.eq.s32.totalorder %s112, 0
    %s115 = sadd.s32 %s114, 1
    %s116 = scalar_select %p113, %s114, %s115
    %p119 = pneg %p113
    %p120 = scmp.eq.s32.totalorder %s10, 3
    %p121 = por %p119, %p120
    %p122 = scmp.ne.s32.totalorder %s114, %s117
    %p123 = scmp.eq.s32.totalorder %s10, 0
    %p124 = por %p122, %p123
    %p125 = scmp.ne.s32.totalorder %s114, %s117
    %p126 = scmp.eq.s32.totalorder %s15, 3
    %p127 = por %p125, %p126
    %p128 = scmp.ne.s32.totalorder %s117, %s118
    %p129 = scmp.eq.s32.totalorder %s15, 0
    %p130 = por %p128, %p129
    %p131 = scmp.ne.s32.totalorder %s117, %s118
    %p132 = scmp.eq.s32.totalorder %s16, 3
    %p133 = por %p131, %p132
    %p135 = scmp.ne.s32.totalorder %s118, %s134
    %p136 = scmp.eq.s32.totalorder %s16, 0
    %p137 = por %p135, %p136
    %p138 = scmp.le.s32.totalorder 1, %s10
    %p139 = scmp.lt.s32.totalorder %s10, 5
    %p140 = pnand %p138, %p139
    %p141 = pneg %p140
    // Predicated region
    $region9: #{tpu_custom_call.1} parent=5 // pred_check
      _
    $region10: #{tpu_custom_call.1} parent=5 // pred_check_branch
      %143 = sbr.rel (%p140) target = $region12
    $region11: #{tpu_custom_call.1} parent=5 // pred_region
      %s144 = ssub.s32 %s10, 1
      // Predicated region
      $region13: #{tpu_custom_call.1} parent=11 // pred_check
        %p145 = pneg %p83
      $region14: #{tpu_custom_call.1} parent=11 // pred_check_branch
        %147 = sbr.rel (%p145) target = $region16
      $region15: #{tpu_custom_call.1} parent=11 // pred_region
        _
      $region16: #{tpu_custom_call.1} parent=11 // pred_fallthru
        _
      // Predicated region
      $region17: #{tpu_custom_call.1} parent=11 // pred_check
        %p148 = pneg %p104
      $region18: #{tpu_custom_call.1} parent=11 // pred_check_branch
        %150 = sbr.rel (%p148) target = $region20
      $region19: #{tpu_custom_call.1} parent=11 // pred_region
        _
      $region20: #{tpu_custom_call.1} parent=11 // pred_fallthru
        _
    $region12: #{tpu_custom_call.1} parent=5 // pred_fallthru
      _
    %p151 = scmp.lt.s32.totalorder %s10, 4
    // Predicated region
    $region21: #{tpu_custom_call.1} parent=5 // pred_check
      %p152 = pneg %p151
    $region22: #{tpu_custom_call.1} parent=5 // pred_check_branch
      %154 = sbr.rel (%p152) target = $region24
    $region23: #{tpu_custom_call.1} parent=5 // pred_region
      // Predicated region
      $region25: #{tpu_custom_call.1} parent=23 // pred_check
        %p155 = pneg %p30
      $region26: #{tpu_custom_call.1} parent=23 // pred_check_branch
        %157 = sbr.rel (%p155) target = $region28
      $region27: #{tpu_custom_call.1} parent=23 // pred_region
        %s158 = smul.u32 4, %s10
        %p159 = scmp.lt.s32.totalorder %s158, 15
        %s160 = scalar_select %p159, %s158, 15
        %s161 = smul.addr %s160, 2
        %s162 = smul.addr %s161, 8
        %s163 = scalar_lea.vmem %s0, %s162
        %s164 = smul.u32 4, %s10
      $region28: #{tpu_custom_call.1} parent=23 // pred_fallthru
        _
      // Predicated region
      $region29: #{tpu_custom_call.1} parent=23 // pred_check
        %p165 = pneg %p56
      $region30: #{tpu_custom_call.1} parent=23 // pred_check_branch
        %167 = sbr.rel (%p165) target = $region32
      $region31: #{tpu_custom_call.1} parent=23 // pred_region
        %s168 = smul.u32 16, %s10
        %p169 = scmp.lt.s32.totalorder %s168, 63
        %s170 = scalar_select %p169, %s168, 63
        %s171 = smul.addr %s170, 4
        %s172 = scalar_lea.vmem %s1, %s171
        %s173 = smul.u32 16, %s10
      $region32: #{tpu_custom_call.1} parent=23 // pred_fallthru
        _
    $region24: #{tpu_custom_call.1} parent=5 // pred_fallthru
      _
    %p174 = scmp.le.s32.totalorder 1, %s10
    %p175 = scmp.lt.s32.totalorder %s10, 5
    %p176 = pnand %p174, %p175
    %p177 = pneg %p176
    // Predicated region
    $region33: #{tpu_custom_call.1} parent=5 // pred_check
      _
    $region34: #{tpu_custom_call.1} parent=5 // pred_check_branch
      %179 = sbr.rel (%p176) target = $region36
    $region35: #{tpu_custom_call.1} parent=5 // pred_region
      %s180 = ssub.s32 %s10, 1
      %s181 = smul.u32 4, %s15
      %p182 = scmp.lt.s32.totalorder %s181, 15
      %s183 = scalar_select %p182, %s181, 15
      %s184 = smul.addr %s183, 2
      %s185 = smul.addr %s184, 8
      %s186 = scalar_lea.vmem %s0, %s185
      %p187 = pneg %p36
      %p188 = pneg %p33
      %s189 = smul.u32 16, %s15
      %p190 = scmp.lt.s32.totalorder %s189, 63
      %s191 = scalar_select %p190, %s189, 63
      %s192 = smul.addr %s191, 4
      %s193 = scalar_lea.vmem %s1, %s192
      %p194 = pneg %p62
      %p195 = pneg %p59
      %p196 = pneg %p83
      %p197 = pneg %p80
      %p198 = pneg %p104
      %p199 = pneg %p101
      %p200 = pneg %p130
      %p201 = pneg %p127
      %s202 = smul.u32 4, %s15
      %p203 = scmp.lt.s32.totalorder %s202, 15
      %s204 = scalar_select %p203, %s202, 15
      %s205 = smul.addr %s204, 4
      %s206 = smul.addr %s205, 8
      %s207 = scalar_lea.vmem %s4, %s206
      %s208 = smul.u32 4, %s15
      %p209 = scmp.lt.s32.totalorder %s208, 15
      %s210 = scalar_select %p209, %s208, 15
      %s211 = smul.addr %s210, 2
      %s212 = smul.addr %s211, 8
      %s213 = scalar_lea.vmem %s0, %s212
      %s214 = smul.u32 4, %s15
      %s215 = smul.u32 16, %s15
      %p216 = scmp.lt.s32.totalorder %s215, 63
      %s217 = scalar_select %p216, %s215, 63
      %s218 = smul.addr %s217, 4
      %s219 = scalar_lea.vmem %s1, %s218
      %s220 = smul.u32 16, %s15
      %s221 = smul.u32 4, %s15
      %p222 = scmp.lt.s32.totalorder %s221, 15
      %s223 = scalar_select %p222, %s221, 15
      %s224 = smul.addr %s223, 4
      %s225 = smul.addr %s224, 8
      %s226 = scalar_lea.vmem %s4, %s225
      %s227 = smul.u32 4, %s15
      %v229 = vld [vmem:[%s219] sm:$0xf]
      %v230 = vld [vmem:[%s219 + $0x4] sm:$0xf]
      %v231 = vld [vmem:[%s219 + $0x8] sm:$0xf]
      %v232 = vld [vmem:[%s219 + $0xc] sm:$0xf]
      %v233 = vld [vmem:[%s219 + $0x10] sm:$0xf]
      %v234 = vld [vmem:[%s219 + $0x14] sm:$0xf]
      %v235 = vld [vmem:[%s219 + $0x18] sm:$0xf]
      %v236 = vld [vmem:[%s219 + $0x1c] sm:$0xf]
      %v237 = vld [vmem:[%s219 + $0x20] sm:$0xf]
      %v238 = vld [vmem:[%s219 + $0x24] sm:$0xf]
      %v239 = vld [vmem:[%s219 + $0x28] sm:$0xf]
      %v240 = vld [vmem:[%s219 + $0x2c] sm:$0xf]
      %v241 = vld [vmem:[%s219 + $0x30] sm:$0xf]
      %v242 = vld [vmem:[%s219 + $0x34] sm:$0xf]
      %v243 = vld [vmem:[%s219 + $0x38] sm:$0xf]
      %v244 = vld [vmem:[%s219 + $0x3c] sm:$0xf]
      %v245 = vld [vmem:[%s2] sm:$0x3]
      %v246 = vld [vmem:[%s3] sm:$0x1]
      %v248 = vlaneseq
      %v249 = vshrl.u32 %v248, 7
      %v250 = vsub.s32 0, %v249
      %v251 = vrot.slane %v246, %v250
      %v269 = vunpack.c.l.b16 %v229
      %v270 = vunpack.c.l.b16 %v230
      %v271 = vunpack.c.l.b16 %v231
      %v272 = vunpack.c.l.b16 %v232
      %v273 = vunpack.c.l.b16 %v233
      %v274 = vunpack.c.l.b16 %v234
      %v275 = vunpack.c.l.b16 %v235
      %v276 = vunpack.c.l.b16 %v236
      %v277 = vunpack.c.l.b16 %v237
      %v278 = vunpack.c.l.b16 %v238
      %v279 = vunpack.c.l.b16 %v239
      %v280 = vunpack.c.l.b16 %v240
      %v281 = vunpack.c.l.b16 %v241
      %v282 = vunpack.c.l.b16 %v242
      %v283 = vunpack.c.l.b16 %v243
      %v284 = vunpack.c.l.b16 %v244
      %v285 = vpack.c.b16 %v270, %v269
      %v286 = vpack.c.b16 %v272, %v271
      %v287 = vpack.c.b16 %v274, %v273
      %v288 = vpack.c.b16 %v276, %v275
      %v289 = vpack.c.b16 %v278, %v277
      %v290 = vpack.c.b16 %v280, %v279
      %v291 = vpack.c.b16 %v282, %v281
      %v292 = vpack.c.b16 %v284, %v283
      %vm293 = vcmask 31744
      %v295 = vsel %vm293, %v285, 0
      %v298 = vsel %vm293, %v286, 0
      %v301 = vsel %vm293, %v287, 0
      %v304 = vsel %vm293, %v288, 0
      %v307 = vsel %vm293, %v289, 0
      %v310 = vsel %vm293, %v290, 0
      %v313 = vsel %vm293, %v291, 0
      %v316 = vsel %vm293, %v292, 0
      %vm318 = vcmask 1041408
      %v320 = vsel %vm318, %v245, 0
      %322 = vmatprep.subr.bf16.mxu0 0
      %323 = vmatpush1.bf16.msra.mxu0 %v320
      %324 = vmatprep.subr.bf16.mxu0 0
      %325 = vmatpush1.bf16.msra.mxu0 0
      %326 = vmatprep.subr.bf16.mxu0 0
      %327 = vmatpush1.bf16.msra.mxu0 0
      %328 = vmatprep.subr.bf16.mxu0 0
      %329 = vmatpush1.bf16.msra.mxu0 0
      %330 = vmatprep.subr.bf16.mxu0 0
      %331 = vmatpush1.bf16.msra.mxu0 0
      %332 = vmatprep.subr.bf16.mxu0 0
      %333 = vmatpush1.bf16.msra.mxu0 0
      %334 = vmatprep.subr.bf16.mxu0 0
      %335 = vmatpush1.bf16.msra.mxu0 0
      %336 = vmatprep.subr.bf16.mxu0 0
      %337 = vmatpush1.bf16.msra.mxu0 0
      %338 = vmatprep.subr.bf16.mxu0 0
      %339 = vmatpush1.bf16.msra.mxu0 0
      %340 = vmatprep.subr.bf16.mxu0 0
      %341 = vmatpush1.bf16.msra.mxu0 0
      %342 = vmatprep.subr.bf16.mxu0 0
      %343 = vmatpush1.bf16.msra.mxu0 0
      %344 = vmatprep.subr.bf16.mxu0 0
      %345 = vmatpush1.bf16.msra.mxu0 0
      %346 = vmatprep.subr.bf16.mxu0 0
      %347 = vmatpush1.bf16.msra.mxu0 0
      %348 = vmatprep.subr.bf16.mxu0 0
      %349 = vmatpush1.bf16.msra.mxu0 0
      %350 = vmatprep.subr.bf16.mxu0 0
      %351 = vmatpush1.bf16.msra.mxu0 0
      %352 = vmatprep.subr.bf16.mxu0 0
      %353 = vmatpush1.bf16.msra.mxu0 0
      %354 = vmatprep.mubr.bf16.mxu0 0
      %355 = vmatmul.mubr.bf16.gmra.mrb[0].mxu0 %v295
      %v356 = vpop.f32.mrb[0].mxu0
      %v357 = vadd.f32 %v251, %v356
      %v358 = vpop.f32.mrb[0].mxu0
      %v359 = vpop.f32.mrb[0].mxu0
      %v360 = vadd.f32 %v251, %v359
      %v361 = vpop.f32.mrb[0].mxu0
      %362 = vmatprep.mubr.bf16.mxu0 0
      %363 = vmatmul.mubr.bf16.gmra.mrb[0].mxu0 %v298
      %v364 = vpop.f32.mrb[0].mxu0
      %v365 = vadd.f32 %v251, %v364
      %v366 = vpop.f32.mrb[0].mxu0
      %v367 = vpop.f32.mrb[0].mxu0
      %v368 = vadd.f32 %v251, %v367
      %v369 = vpop.f32.mrb[0].mxu0
      %370 = vmatprep.mubr.bf16.mxu0 0
      %371 = vmatmul.mubr.bf16.gmra.mrb[0].mxu0 %v301
      %v372 = vpop.f32.mrb[0].mxu0
      %v373 = vadd.f32 %v251, %v372
      %v374 = vpop.f32.mrb[0].mxu0
      %v375 = vpop.f32.mrb[0].mxu0
      %v376 = vadd.f32 %v251, %v375
      %v377 = vpop.f32.mrb[0].mxu0
      %378 = vmatprep.mubr.bf16.mxu0 0
      %379 = vmatmul.mubr.bf16.gmra.mrb[0].mxu0 %v304
      %v380 = vpop.f32.mrb[0].mxu0
      %v381 = vadd.f32 %v251, %v380
      %v382 = vpop.f32.mrb[0].mxu0
      %v383 = vpop.f32.mrb[0].mxu0
      %v384 = vadd.f32 %v251, %v383
      %v385 = vpop.f32.mrb[0].mxu0
      %386 = vmatprep.mubr.bf16.mxu0 0
      %387 = vmatmul.mubr.bf16.gmra.mrb[0].mxu0 %v307
      %v388 = vpop.f32.mrb[0].mxu0
      %v389 = vadd.f32 %v251, %v388
      %v390 = vpop.f32.mrb[0].mxu0
      %v391 = vpop.f32.mrb[0].mxu0
      %v392 = vadd.f32 %v251, %v391
      %v393 = vpop.f32.mrb[0].mxu0
      %394 = vmatprep.mubr.bf16.mxu0 0
      %395 = vmatmul.mubr.bf16.gmra.mrb[0].mxu0 %v310
      %v396 = vpop.f32.mrb[0].mxu0
      %v397 = vadd.f32 %v251, %v396
      %v398 = vpop.f32.mrb[0].mxu0
      %v399 = vpop.f32.mrb[0].mxu0
      %v400 = vadd.f32 %v251, %v399
      %v401 = vpop.f32.mrb[0].mxu0
      %402 = vmatprep.mubr.bf16.mxu0 0
      %403 = vmatmul.mubr.bf16.gmra.mrb[0].mxu0 %v313
      %v404 = vpop.f32.mrb[0].mxu0
      %v405 = vadd.f32 %v251, %v404
      %v406 = vpop.f32.mrb[0].mxu0
      %v407 = vpop.f32.mrb[0].mxu0
      %v408 = vadd.f32 %v251, %v407
      %v409 = vpop.f32.mrb[0].mxu0
      %410 = vmatprep.mubr.bf16.mxu0 0
      %411 = vmatmul.mubr.bf16.gmra.mrb[0].mxu0 %v316
      %v412 = vpop.f32.mrb[0].mxu0
      %v413 = vadd.f32 %v251, %v412
      %v414 = vpop.f32.mrb[0].mxu0
      %v415 = vpop.f32.mrb[0].mxu0
      %v416 = vadd.f32 %v251, %v415
      %v417 = vpop.f32.mrb[0].mxu0
      %418 = vdwg.mxu0
      %v419 = vmax.f32 %v357, 0.0
      %v420 = vmax.f32 %v360, 0.0
      %v421 = vmax.f32 %v365, 0.0
      %v422 = vmax.f32 %v368, 0.0
      %v423 = vmax.f32 %v373, 0.0
      %v424 = vmax.f32 %v376, 0.0
      %v425 = vmax.f32 %v381, 0.0
      %v426 = vmax.f32 %v384, 0.0
      %v427 = vmax.f32 %v389, 0.0
      %v428 = vmax.f32 %v392, 0.0
      %v429 = vmax.f32 %v397, 0.0
      %v430 = vmax.f32 %v400, 0.0
      %v431 = vmax.f32 %v405, 0.0
      %v432 = vmax.f32 %v408, 0.0
      %v433 = vmax.f32 %v413, 0.0
      %v434 = vmax.f32 %v416, 0.0
      %v435 = vld [vmem:[%s213] sm:$0xff]
      %v436 = vld [vmem:[%s213 + $0x8] sm:$0xff]
      %v437 = vld [vmem:[%s213 + $0x10] sm:$0xff]
      %v438 = vld [vmem:[%s213 + $0x18] sm:$0xff]
      %v439 = vld [vmem:[%s213 + $0x20] sm:$0xff]
      %v440 = vld [vmem:[%s213 + $0x28] sm:$0xff]
      %v441 = vld [vmem:[%s213 + $0x30] sm:$0xff]
      %v442 = vld [vmem:[%s213 + $0x38] sm:$0xff]
      %v443 = vadd.f32 %v435, %v419
      %v444 = vadd.f32 %v436, %v420
      %v445 = vadd.f32 %v435, %v421
      %v446 = vadd.f32 %v436, %v422
      %v447 = vadd.f32 %v437, %v423
      %v448 = vadd.f32 %v438, %v424
      %v449 = vadd.f32 %v437, %v425
      %v450 = vadd.f32 %v438, %v426
      %v451 = vadd.f32 %v439, %v427
      %v452 = vadd.f32 %v440, %v428
      %v453 = vadd.f32 %v439, %v429
      %v454 = vadd.f32 %v440, %v430
      %v455 = vadd.f32 %v441, %v431
      %v456 = vadd.f32 %v442, %v432
      %v457 = vadd.f32 %v441, %v433
      %v458 = vadd.f32 %v442, %v434
      %vm459 = vcmask 64512
      %460 = vst.msk [vmem:[%s226] sm:$0xff] %vm459, %v443
      %461 = vst.msk [vmem:[%s226 + $0x8] sm:$0xff] %vm459, %v444
      %462 = vst.msk [vmem:[%s226 + $0x10] sm:$0xff] %vm459, %v445
      %463 = vst.msk [vmem:[%s226 + $0x18] sm:$0xff] %vm459, %v446
      %464 = vst.msk [vmem:[%s226 + $0x20] sm:$0xff] %vm459, %v447
      %465 = vst.msk [vmem:[%s226 + $0x28] sm:$0xff] %vm459, %v448
      %466 = vst.msk [vmem:[%s226 + $0x30] sm:$0xff] %vm459, %v449
      %467 = vst.msk [vmem:[%s226 + $0x38] sm:$0xff] %vm459, %v450
      %468 = vst.msk [vmem:[%s226 + $0x40] sm:$0xff] %vm459, %v451
      %469 = vst.msk [vmem:[%s226 + $0x48] sm:$0xff] %vm459, %v452
      %470 = vst.msk [vmem:[%s226 + $0x50] sm:$0xff] %vm459, %v453
      %471 = vst.msk [vmem:[%s226 + $0x58] sm:$0xff] %vm459, %v454
      %472 = vst.msk [vmem:[%s226 + $0x60] sm:$0xff] %vm459, %v455
      %473 = vst.msk [vmem:[%s226 + $0x68] sm:$0xff] %vm459, %v456
      %474 = vst.msk [vmem:[%s226 + $0x70] sm:$0xff] %vm459, %v457
      %475 = vst.msk [vmem:[%s226 + $0x78] sm:$0xff] %vm459, %v458
      %s476 = smul.u32 4, %s15
      %p477 = scmp.lt.s32.totalorder %s476, 15
      %s478 = scalar_select %p477, %s476, 15
      %s479 = smul.addr %s478, 4
      %s480 = smul.addr %s479, 8
      %s481 = scalar_lea.vmem %s4, %s480
      // Predicated region
      $region37: #{tpu_custom_call.1} parent=35 // pred_check
        %p482 = pneg %p127
      $region38: #{tpu_custom_call.1} parent=35 // pred_check_branch
        %484 = sbr.rel (%p482) target = $region40
      $region39: #{tpu_custom_call.1} parent=35 // pred_region
        %s485 = smul.u32 4, %s15
      $region40: #{tpu_custom_call.1} parent=35 // pred_fallthru
        _
    $region36: #{tpu_custom_call.1} parent=5 // pred_fallthru
      _
    %p486 = scmp.le.s32.totalorder 2, %s10
    // Predicated region
    $region41: #{tpu_custom_call.1} parent=5 // pred_check
      %p487 = pneg %p486
    $region42: #{tpu_custom_call.1} parent=5 // pred_check_branch
      %489 = sbr.rel (%p487) target = $region44
    $region43: #{tpu_custom_call.1} parent=5 // pred_region
      %s490 = ssub.s32 %s10, 2
      // Predicated region
      $region45: #{tpu_custom_call.1} parent=43 // pred_check
        %p491 = pneg %p133
      $region46: #{tpu_custom_call.1} parent=43 // pred_check_branch
        %493 = sbr.rel (%p491) target = $region48
      $region47: #{tpu_custom_call.1} parent=43 // pred_region
        %s494 = smul.u32 4, %s16
        %p495 = scmp.lt.s32.totalorder %s494, 15
        %s496 = scalar_select %p495, %s494, 15
        %s497 = smul.addr %s496, 4
        %s498 = smul.addr %s497, 8
        %s499 = scalar_lea.vmem %s4, %s498
      $region48: #{tpu_custom_call.1} parent=43 // pred_fallthru
        _
    $region44: #{tpu_custom_call.1} parent=5 // pred_fallthru
      _
  $region6: #{tpu_custom_call.1} parent=0 // loop_footer
    %s14 = sadd.s32 1, %s10
  $region7: #{tpu_custom_call.1} parent=0 // loop_footer_branch
    %9 = sbr.rel target = $region3
  $region8: #{tpu_custom_call.1} parent=0 // loop_exit
    _

</llo_original>
